<compile_context>
chip_gen: v6e
topology: v6e:2x2x1
jax: 0.10.0
libtpu: 0.0.40
codegen_flags: <defaults>
</compile_context>

<pallas_src>
import jax
import jax.numpy as jnp
from jax.experimental import pallas as pl
from jax.experimental.pallas import tpu as pltpu

LANE = 128  # TPU vreg lane width (last-dim tile unit)


def linear_kernel(wb_ref, x_ref, o_ref):
    # wb_ref: SMEM (2,) = [weight, bias]; x_ref / o_ref: VMEM (tile_rows, 128)
    w = wb_ref[0]
    b = wb_ref[1]
    o_ref[...] = x_ref[...] * w + b  # pure VPU fused multiply-add


def great_neural_network(x, weight, bias, *, row_tile=1024):
    """x: (N, 1) f32, weight: (1, 1) f32, bias: (1,) f32 -> (N, 1) f32."""
    n, f = x.shape
    assert f == 1 and weight.shape == (1, 1) and bias.shape == (1,)

    # Pack the two scalars into one flat SMEM array.
    wb = jnp.stack([weight[0, 0], bias[0]])  # (2,)

    # Lane-dense layout: flatten, pad to full 128-lane rows (and to a whole
    # number of row tiles when the grid has more than one step).
    rows_needed = pl.cdiv(n, LANE)
    if rows_needed <= row_tile:
        tile_rows = rows_needed          # single block == full array (shape rule ok)
        rows = rows_needed
    else:
        tile_rows = row_tile
        rows = pl.cdiv(rows_needed, tile_rows) * tile_rows

    padded = rows * LANE
    x_flat = jnp.pad(x.reshape(-1), (0, padded - n))
    x2d = x_flat.reshape(rows, LANE)

    grid = (rows // tile_rows,)

    out2d = pl.pallas_call(
        linear_kernel,
        out_shape=jax.ShapeDtypeStruct((rows, LANE), x.dtype),
        grid=grid,
        in_specs=[
            pl.BlockSpec(memory_space=pltpu.MemorySpace.SMEM),      # wb scalars
            pl.BlockSpec((tile_rows, LANE), lambda i: (i, 0)),       # x tile
        ],
        out_specs=pl.BlockSpec((tile_rows, LANE), lambda i: (i, 0)),
        compiler_params=pltpu.CompilerParams(
            # Memory-bound elementwise op: grid steps are independent, so let
            # v7x's two TensorCores split the row loop (no-op on v5e/v6e).
            dimension_semantics=("parallel",),
        ),
    )(wb, x2d)

    # Drop padding, restore the PyTorch (batch, out_features) shape.
    return out2d.reshape(-1)[:n].reshape(n, 1)


if __name__ == "__main__":
    key = jax.random.PRNGKey(0)
    kx, kw, kb = jax.random.split(key, 3)

    # Small batch of scalar features: (batch=8, in_features=1)
    x = jax.random.normal(kx, (8, 1), dtype=jnp.float32)

    # Deterministic parameter init (nn.Linear(1, 1) shapes: W (1,1), b (1,))
    weight = jax.random.uniform(kw, (1, 1), dtype=jnp.float32, minval=-1.0, maxval=1.0)
    bias = jax.random.uniform(kb, (1,), dtype=jnp.float32, minval=-1.0, maxval=1.0)

    y = great_neural_network(x, weight, bias)
    y = jax.block_until_ready(y)

    # Pure-JAX reference check (same semantics as PyTorch x @ W^T + b)
    y_ref = x @ weight.T + bias
    assert y.shape == (8, 1)
    assert jnp.allclose(y, y_ref, atol=1e-6), "mismatch vs reference (small)"

    # Extra check: non-multiple-of-128 batch with a multi-step grid
    # (small row_tile so padding + pipelined grid path is exercised cheaply).
    x_big = jax.random.normal(kx, (3000, 1), dtype=jnp.float32)
    y_big = jax.block_until_ready(
        great_neural_network(x_big, weight, bias, row_tile=8)
    )
    y_big_ref = x_big @ weight.T + bias
    assert y_big.shape == (3000, 1)
    assert jnp.allclose(y_big, y_big_ref, atol=1e-6), "mismatch vs reference (grid)"

    print("KERNEL_OK")
</pallas_src>

<mosaic_0001>
module attributes {stable_mosaic.version = 11 : i64} {
  func.func @linear_kernel(%arg0: i32, %arg1: memref<2xf32, #tpu.memory_space<smem>>, %arg2: memref<1x128xf32, #tpu.memory_space<vmem>>, %arg3: memref<1x128xf32, #tpu.memory_space<vmem>>) attributes {dimension_semantics = [#tpu.dimension_semantics<parallel>], iteration_bounds = array<i64: 1>, scalar_prefetch = 0 : i64, scratch_operands = 0 : i64, tpu.core_type = #tpu.core_type<tc>, window_params = [{transform_indices = @transform_0, window_bounds = array<i64: 2>}, {transform_indices = @transform_1, window_bounds = array<i64: 1, 128>}, {transform_indices = @transform_2, window_bounds = array<i64: 1, 128>}]} {
    %c0 = arith.constant 0 : index
    %0 = memref.load %arg1[%c0] : memref<2xf32, #tpu.memory_space<smem>>
    %c1 = arith.constant 1 : index
    %1 = memref.load %arg1[%c1] : memref<2xf32, #tpu.memory_space<smem>>
    %c0_0 = arith.constant 0 : index
    %c0_1 = arith.constant 0 : index
    %2 = vector.load %arg2[%c0_0, %c0_1] : memref<1x128xf32, #tpu.memory_space<vmem>>, vector<1x128xf32>
    %3 = vector.broadcast %0 : f32 to vector<1x128xf32>
    %4 = arith.mulf %2, %3 : vector<1x128xf32>
    %5 = vector.broadcast %1 : f32 to vector<1x128xf32>
    %6 = arith.addf %4, %5 : vector<1x128xf32>
    %c0_2 = arith.constant 0 : index
    %c0_3 = arith.constant 0 : index
    %7 = vector.load %arg3[%c0_2, %c0_3] : memref<1x128xf32, #tpu.memory_space<vmem>>, vector<1x128xf32>
    tpu.vector_store %arg3[%c0_2, %c0_3], %6 {strides = array<i32>} : memref<1x128xf32, #tpu.memory_space<vmem>>, vector<1x128xf32>,
    return
  }
  func.func @transform_0(%arg0: i32) -> i32 {
    %c0_i32 = arith.constant 0 : i32
    %c0_i32_0 = arith.constant 0 : i32
    return %c0_i32 : i32
  }
  func.func @transform_1(%arg0: i32) -> (i32, i32) {
    %c0_i32 = arith.constant 0 : i32
    %c0_i32_0 = arith.constant 0 : i32
    return %arg0, %c0_i32 : i32, i32
  }
  func.func @transform_2(%arg0: i32) -> (i32, i32) {
    %c0_i32 = arith.constant 0 : i32
    %c0_i32_0 = arith.constant 0 : i32
    return %arg0, %c0_i32 : i32, i32
  }
}

</mosaic_0001>

<llo_original>
// kernel: tpu_custom_call.1
$region0: #{tpu_custom_call.1}
  #allocation0 [shape = 'u32[]', space=smem, size = 0x4, offset = 0x4, fixed_abs, tag = 'smem constant byte address 0x4 - core index']
  #allocation1 [shape = 'u32[144,128]{1,0:T(1,128)}', space=vmem, size = 0x12000, scoped, tag = 'internal scratch']
  %s0 = inlined_call_operand.hbm [shape: f32[2], index: 0, kind: input, shape index: {}]
  %s1 = inlined_call_operand.vmem [shape: f32[1,128], index: 1, kind: input, shape index: {}]
  %s2 = inlined_call_operand.hbm [shape: f32[1,128], index: 2, kind: output, shape index: {}]
  %s3 = sld [smem:[#allocation0]]
  $region22: #{tpu_custom_call.1} parent=0
    _
  %s5 = ssub.s32 1, %s3
  %s6 = scalar_select 0, %s5, %s3
  $region1: #{tpu_custom_call.1} parent=0
    #allocation2 [shape = 'u8[512]{0}', space=smem, size = 0x200, scoped, tag = 'input window, operand 0, single buffered']
    #allocation3 [shape = 's32[1]{0}', space=sflag, size = 0x4, scoped, tag = 'scoped memory for tpu_custom_call.1']
    #allocation4 [shape = 's32[1]{0}', space=sflag, size = 0x4, scoped, tag = 'scoped memory for tpu_custom_call.1']
    #allocation5 [shape = 'u8[512]{0}', space=vmem, size = 0x400, scoped, tag = 'output window, operand 0, single buffered']
    %7 = vsyncpa [#allocation4], 0
    %8 = vsyncpa [#allocation3], 0
    // Predicated region
    $region2: #{tpu_custom_call.1} parent=1 // pred_check
      _
    $region3: #{tpu_custom_call.1} parent=1 // pred_check_branch
      %10 = sbr.rel (0) target = $region5
    $region4: #{tpu_custom_call.1} parent=1 // pred_region
      %s12 = ssub.s32 16, 16
      %13 = vsyncadd [#allocation4], %s12
      %16 = dma.hbm_to_smem %s0, 16, [#allocation2], [#allocation4]
    $region5: #{tpu_custom_call.1} parent=1 // pred_fallthru
      _
    // Predicated region
    $region6: #{tpu_custom_call.1} parent=1 // pred_check
      _
    $region7: #{tpu_custom_call.1} parent=1 // pred_check_branch
      %18 = sbr.rel (0) target = $region9
    $region8: #{tpu_custom_call.1} parent=1 // pred_region
      _
    $region9: #{tpu_custom_call.1} parent=1 // pred_fallthru
      _
    // Predicated region
    $region10: #{tpu_custom_call.1} parent=1 // pred_check
      _
    $region11: #{tpu_custom_call.1} parent=1 // pred_check_branch
      %20 = sbr.rel (0) target = $region13
    $region12: #{tpu_custom_call.1} parent=1 // pred_region
      %21 = dma.done [#allocation4], 16
    $region13: #{tpu_custom_call.1} parent=1 // pred_fallthru
      _
    %22 = sfence
    %s23 = sld [smem:[#allocation2]]
    %s24 = sld [smem:[#allocation2 + $0x1]]
    %v25 = vld [vmem:[%s1] sm:$0x1]
    %v26 = vstv %s23
    %v27 = vmul.f32 %v25, %v26
    %v28 = vstv %s24
    %v29 = vadd.f32 %v27, %v28
    %30 = vst [vmem:[#allocation5] sm:$0x1] %v29
    // Predicated region
    $region14: #{tpu_custom_call.1} parent=1 // pred_check
      _
    $region15: #{tpu_custom_call.1} parent=1 // pred_check_branch
      %32 = sbr.rel (0) target = $region17
    $region16: #{tpu_custom_call.1} parent=1 // pred_region
      %s34 = ssub.s32 16, 16
      %35 = vsyncadd [#allocation3], %s34
      %s37 = sshll.u32 [#allocation5], 4
      %s38 = int_to_ptr.vmem [resolvable:$true] %s37
      %40 = dma.vmem_to_hbm [thread:$0]  %s38, 16, %s2, [#allocation3]
    $region17: #{tpu_custom_call.1} parent=1 // pred_fallthru
      _
    // Predicated region
    $region18: #{tpu_custom_call.1} parent=1 // pred_check
      _
    $region19: #{tpu_custom_call.1} parent=1 // pred_check_branch
      %42 = sbr.rel (0) target = $region21
    $region20: #{tpu_custom_call.1} parent=1 // pred_region
      %43 = dma.done [#allocation3], 16
    $region21: #{tpu_custom_call.1} parent=1 // pred_fallthru
      _
    %44 = vsyncpa [#allocation3], 1
    %45 = vsyncpa [#allocation4], 1

</llo_original>
